<compile_context>
chip_gen: v6e
topology: v6e:2x2x1
jax: 0.10.0
libtpu: 0.0.40
codegen_flags: <defaults>
</compile_context>

<pallas_src>
import jax
import jax.numpy as jnp
from jax.experimental import pallas as pl
from jax.experimental.pallas import tpu as pltpu


def _model_kernel(wt_ref, c_ref, x_ref, v3_ref, v2_ref):
    # wt_ref : SMEM (IN*OUT,) f32, flattened as [k * OUT + o]  (weight.T row-major)
    # c_ref  : SMEM (OUT,)    f32, bias + other (precombined at init time)
    # x_ref  : VMEM (IN,  TB) f32  -- batch on the lane axis
    # v3_ref : VMEM (OUT, TB) f32
    # v2_ref : VMEM (OUT, TB) f32
    in_f = x_ref.shape[0]
    out_f = v2_ref.shape[0]

    # Load the IN (=4) lane-dense rows of x once.
    xr = [x_ref[k:k + 1, :] for k in range(in_f)]   # each (1, TB)

    # Unrolled VPU FMA: v1[o, :] = sum_k wt[k, o] * x[k, :] + (bias + other)[o]
    for o in range(out_f):
        acc = xr[0] * wt_ref[o] + c_ref[o]
        for k in range(1, in_f):
            acc = acc + xr[k] * wt_ref[k * out_f + o]
        v2 = jnp.maximum(acc, 0.0)                  # relu (VPU)
        v2_ref[o:o + 1, :] = v2
        v3_ref[o:o + 1, :] = jax.lax.erf(v2)        # erf  (EUP)


def _choose_block_cols(batch, max_block_cols):
    """Pick the batch-tile width (lane axis)."""
    if batch <= 256:
        return batch                       # single full-extent block (exempt from 128 rule)
    half = -(-batch // 2)                  # >= 2 grid steps so v7x's 2 TCs both work
    half = -(-half // 128) * 128           # lane blocks must be multiples of 128
    return max(128, min(max_block_cols, half))


def model_forward_t(x_t, wt_flat, c, *, max_block_cols=65536):
    """Lane-dense path.
    x_t: (IN, B) f32;  wt_flat: (IN*OUT,) f32 (weight.T flattened);  c: (OUT,) f32.
    Returns (v3_t, v2_t), each (OUT, B).
    Default max_block_cols=65536 -> ~7.3 MiB double-buffered VMEM (fits every gen);
    sweep upward on v6e/v7x if desired.
    """
    in_f, batch = x_t.shape
    out_f = c.shape[0]
    tb = _choose_block_cols(batch, max_block_cols)
    grid = (pl.cdiv(batch, tb),)           # ragged last block handled by Pallas masking

    v3_t, v2_t = pl.pallas_call(
        _model_kernel,
        out_shape=(
            jax.ShapeDtypeStruct((out_f, batch), jnp.float32),   # v3
            jax.ShapeDtypeStruct((out_f, batch), jnp.float32),   # v2
        ),
        grid=grid,
        in_specs=[
            pl.BlockSpec(memory_space=pltpu.MemorySpace.SMEM),   # wt_flat (20,)
            pl.BlockSpec(memory_space=pltpu.MemorySpace.SMEM),   # bias+other (5,)
            pl.BlockSpec((in_f, tb), lambda i: (0, i)),          # x tile, lane-dense
        ],
        out_specs=(
            pl.BlockSpec((out_f, tb), lambda i: (0, i)),
            pl.BlockSpec((out_f, tb), lambda i: (0, i)),
        ),
        compiler_params=pltpu.CompilerParams(
            dimension_semantics=("parallel",),   # batch tiles shard across v7x's 2 TCs
        ),
    )(wt_flat, c, x_t)
    return v3_t, v2_t


def model_forward(x, wt_flat, c, *, max_block_cols=65536):
    """Module-semantics interface: x (B, IN) -> (v3, v2) each (B, OUT).
    The transposes here are layout plumbing; throughput-critical callers should keep
    activations feature-major ((IN, B)) and call model_forward_t directly."""
    v3_t, v2_t = model_forward_t(x.T, wt_flat, c, max_block_cols=max_block_cols)
    return v3_t.T, v2_t.T


def _reference(x, weight, bias, other):
    v0 = x @ weight.T + bias
    v1 = v0 + other
    v2 = jnp.maximum(v1, 0.0)
    v3 = jax.lax.erf(v2)
    return v3, v2


if __name__ == "__main__":
    key = jax.random.PRNGKey(0)
    k_x, k_w, k_b, k_x2 = jax.random.split(key, 4)

    B, IN, OUT = 8, 4, 5
    x = jax.random.normal(k_x, (B, IN), dtype=jnp.float32)

    # Deterministic synthetic "Linear(4, 5)" parameters (PyTorch-uniform-like range).
    bound = 1.0 / (IN ** 0.5)
    weight = jax.random.uniform(k_w, (OUT, IN), minval=-bound, maxval=bound,
                                dtype=jnp.float32)
    bias = jax.random.uniform(k_b, (OUT,), minval=-bound, maxval=bound,
                              dtype=jnp.float32)
    # Broadcast-compatible replacement for the incompatible default other=(4,).
    other = jnp.array([1.0, 2.0, 3.0, 4.0, 5.0], dtype=jnp.float32)

    # --- parameter-init-time preprocessing (outside the per-call hot path) ---
    wt_flat = weight.T.reshape(-1).astype(jnp.float32)          # (IN*OUT,), [k*OUT + o]
    c = (bias + other).astype(jnp.float32)                      # (OUT,)

    # Small batch (single full-extent block).
    v3, v2 = model_forward(x, wt_flat, c)
    jax.block_until_ready((v3, v2))
    v3_ref, v2_ref = _reference(x, weight, bias, other)
    assert jnp.allclose(v2, v2_ref, atol=1e-5, rtol=1e-5)
    assert jnp.allclose(v3, v3_ref, atol=1e-5, rtol=1e-5)

    # Larger, non-multiple-of-128 batch: exercises 128-multiple lane tiles,
    # >=2 grid steps, and the ragged (masked) last block -- no pad/slice copies.
    B2 = 1000
    x2 = jax.random.normal(k_x2, (B2, IN), dtype=jnp.float32)
    v3b_t, v2b_t = model_forward_t(x2.T, wt_flat, c)
    jax.block_until_ready((v3b_t, v2b_t))
    v3b_ref, v2b_ref = _reference(x2, weight, bias, other)
    assert jnp.allclose(v2b_t.T, v2b_ref, atol=1e-5, rtol=1e-5)
    assert jnp.allclose(v3b_t.T, v3b_ref, atol=1e-5, rtol=1e-5)

    print("KERNEL_OK")
</pallas_src>

<mosaic_0001>
module attributes {stable_mosaic.version = 11 : i64} {
  func.func @_model_kernel(%arg0: i32, %arg1: memref<20xf32, #tpu.memory_space<smem>>, %arg2: memref<5xf32, #tpu.memory_space<smem>>, %arg3: memref<4x8xf32, #tpu.memory_space<vmem>>, %arg4: memref<5x8xf32, #tpu.memory_space<vmem>>, %arg5: memref<5x8xf32, #tpu.memory_space<vmem>>) attributes {dimension_semantics = [#tpu.dimension_semantics<parallel>], iteration_bounds = array<i64: 1>, scalar_prefetch = 0 : i64, scratch_operands = 0 : i64, tpu.core_type = #tpu.core_type<tc>, window_params = [{transform_indices = @transform_0, window_bounds = array<i64: 20>}, {transform_indices = @transform_1, window_bounds = array<i64: 5>}, {transform_indices = @transform_2, window_bounds = array<i64: 4, 8>}, {transform_indices = @transform_3, window_bounds = array<i64: 5, 8>}, {transform_indices = @transform_4, window_bounds = array<i64: 5, 8>}]} {
    %c0 = arith.constant 0 : index
    %c0_0 = arith.constant 0 : index
    %0 = vector.load %arg3[%c0, %c0_0] : memref<4x8xf32, #tpu.memory_space<vmem>>, vector<1x8xf32>
    %c1 = arith.constant 1 : index
    %c0_1 = arith.constant 0 : index
    %1 = vector.load %arg3[%c1, %c0_1] : memref<4x8xf32, #tpu.memory_space<vmem>>, vector<1x8xf32>
    %c2 = arith.constant 2 : index
    %c0_2 = arith.constant 0 : index
    %2 = vector.load %arg3[%c2, %c0_2] : memref<4x8xf32, #tpu.memory_space<vmem>>, vector<1x8xf32>
    %c3 = arith.constant 3 : index
    %c0_3 = arith.constant 0 : index
    %3 = vector.load %arg3[%c3, %c0_3] : memref<4x8xf32, #tpu.memory_space<vmem>>, vector<1x8xf32>
    %c0_4 = arith.constant 0 : index
    %4 = memref.load %arg1[%c0_4] : memref<20xf32, #tpu.memory_space<smem>>
    %5 = vector.broadcast %4 : f32 to vector<1x8xf32>
    %6 = arith.mulf %0, %5 : vector<1x8xf32>
    %c0_5 = arith.constant 0 : index
    %7 = memref.load %arg2[%c0_5] : memref<5xf32, #tpu.memory_space<smem>>
    %8 = vector.broadcast %7 : f32 to vector<1x8xf32>
    %9 = arith.addf %6, %8 : vector<1x8xf32>
    %c5 = arith.constant 5 : index
    %10 = memref.load %arg1[%c5] : memref<20xf32, #tpu.memory_space<smem>>
    %11 = vector.broadcast %10 : f32 to vector<1x8xf32>
    %12 = arith.mulf %1, %11 : vector<1x8xf32>
    %13 = arith.addf %9, %12 : vector<1x8xf32>
    %c10 = arith.constant 10 : index
    %14 = memref.load %arg1[%c10] : memref<20xf32, #tpu.memory_space<smem>>
    %15 = vector.broadcast %14 : f32 to vector<1x8xf32>
    %16 = arith.mulf %2, %15 : vector<1x8xf32>
    %17 = arith.addf %13, %16 : vector<1x8xf32>
    %c15 = arith.constant 15 : index
    %18 = memref.load %arg1[%c15] : memref<20xf32, #tpu.memory_space<smem>>
    %19 = vector.broadcast %18 : f32 to vector<1x8xf32>
    %20 = arith.mulf %3, %19 : vector<1x8xf32>
    %21 = arith.addf %17, %20 : vector<1x8xf32>
    %cst = arith.constant 0.000000e+00 : f32
    %22 = vector.broadcast %cst : f32 to vector<1x8xf32>
    %23 = arith.maximumf %21, %22 : vector<1x8xf32>
    %c0_6 = arith.constant 0 : index
    %c0_7 = arith.constant 0 : index
    %24 = vector.load %arg5[%c0_6, %c0_7] : memref<5x8xf32, #tpu.memory_space<vmem>>, vector<1x8xf32>
    tpu.vector_store %arg5[%c0_6, %c0_7], %23 {strides = array<i32>} : memref<5x8xf32, #tpu.memory_space<vmem>>, vector<1x8xf32>,
    %25 = math.erf %23 : vector<1x8xf32>
    %c0_8 = arith.constant 0 : index
    %c0_9 = arith.constant 0 : index
    %26 = vector.load %arg4[%c0_8, %c0_9] : memref<5x8xf32, #tpu.memory_space<vmem>>, vector<1x8xf32>
    tpu.vector_store %arg4[%c0_8, %c0_9], %25 {strides = array<i32>} : memref<5x8xf32, #tpu.memory_space<vmem>>, vector<1x8xf32>,
    %c1_10 = arith.constant 1 : index
    %27 = memref.load %arg1[%c1_10] : memref<20xf32, #tpu.memory_space<smem>>
    %28 = vector.broadcast %27 : f32 to vector<1x8xf32>
    %29 = arith.mulf %0, %28 : vector<1x8xf32>
    %c1_11 = arith.constant 1 : index
    %30 = memref.load %arg2[%c1_11] : memref<5xf32, #tpu.memory_space<smem>>
    %31 = vector.broadcast %30 : f32 to vector<1x8xf32>
    %32 = arith.addf %29, %31 : vector<1x8xf32>
    %c6 = arith.constant 6 : index
    %33 = memref.load %arg1[%c6] : memref<20xf32, #tpu.memory_space<smem>>
    %34 = vector.broadcast %33 : f32 to vector<1x8xf32>
    %35 = arith.mulf %1, %34 : vector<1x8xf32>
    %36 = arith.addf %32, %35 : vector<1x8xf32>
    %c11 = arith.constant 11 : index
    %37 = memref.load %arg1[%c11] : memref<20xf32, #tpu.memory_space<smem>>
    %38 = vector.broadcast %37 : f32 to vector<1x8xf32>
    %39 = arith.mulf %2, %38 : vector<1x8xf32>
    %40 = arith.addf %36, %39 : vector<1x8xf32>
    %c16 = arith.constant 16 : index
    %41 = memref.load %arg1[%c16] : memref<20xf32, #tpu.memory_space<smem>>
    %42 = vector.broadcast %41 : f32 to vector<1x8xf32>
    %43 = arith.mulf %3, %42 : vector<1x8xf32>
    %44 = arith.addf %40, %43 : vector<1x8xf32>
    %cst_12 = arith.constant 0.000000e+00 : f32
    %45 = vector.broadcast %cst_12 : f32 to vector<1x8xf32>
    %46 = arith.maximumf %44, %45 : vector<1x8xf32>
    %c1_13 = arith.constant 1 : index
    %c0_14 = arith.constant 0 : index
    %47 = vector.load %arg5[%c1_13, %c0_14] : memref<5x8xf32, #tpu.memory_space<vmem>>, vector<1x8xf32>
    tpu.vector_store %arg5[%c1_13, %c0_14], %46 {strides = array<i32>} : memref<5x8xf32, #tpu.memory_space<vmem>>, vector<1x8xf32>,
    %48 = math.erf %46 : vector<1x8xf32>
    %c1_15 = arith.constant 1 : index
    %c0_16 = arith.constant 0 : index
    %49 = vector.load %arg4[%c1_15, %c0_16] : memref<5x8xf32, #tpu.memory_space<vmem>>, vector<1x8xf32>
    tpu.vector_store %arg4[%c1_15, %c0_16], %48 {strides = array<i32>} : memref<5x8xf32, #tpu.memory_space<vmem>>, vector<1x8xf32>,
    %c2_17 = arith.constant 2 : index
    %50 = memref.load %arg1[%c2_17] : memref<20xf32, #tpu.memory_space<smem>>
    %51 = vector.broadcast %50 : f32 to vector<1x8xf32>
    %52 = arith.mulf %0, %51 : vector<1x8xf32>
    %c2_18 = arith.constant 2 : index
    %53 = memref.load %arg2[%c2_18] : memref<5xf32, #tpu.memory_space<smem>>
    %54 = vector.broadcast %53 : f32 to vector<1x8xf32>
    %55 = arith.addf %52, %54 : vector<1x8xf32>
    %c7 = arith.constant 7 : index
    %56 = memref.load %arg1[%c7] : memref<20xf32, #tpu.memory_space<smem>>
    %57 = vector.broadcast %56 : f32 to vector<1x8xf32>
    %58 = arith.mulf %1, %57 : vector<1x8xf32>
    %59 = arith.addf %55, %58 : vector<1x8xf32>
    %c12 = arith.constant 12 : index
    %60 = memref.load %arg1[%c12] : memref<20xf32, #tpu.memory_space<smem>>
    %61 = vector.broadcast %60 : f32 to vector<1x8xf32>
    %62 = arith.mulf %2, %61 : vector<1x8xf32>
    %63 = arith.addf %59, %62 : vector<1x8xf32>
    %c17 = arith.constant 17 : index
    %64 = memref.load %arg1[%c17] : memref<20xf32, #tpu.memory_space<smem>>
    %65 = vector.broadcast %64 : f32 to vector<1x8xf32>
    %66 = arith.mulf %3, %65 : vector<1x8xf32>
    %67 = arith.addf %63, %66 : vector<1x8xf32>
    %cst_19 = arith.constant 0.000000e+00 : f32
    %68 = vector.broadcast %cst_19 : f32 to vector<1x8xf32>
    %69 = arith.maximumf %67, %68 : vector<1x8xf32>
    %c2_20 = arith.constant 2 : index
    %c0_21 = arith.constant 0 : index
    %70 = vector.load %arg5[%c2_20, %c0_21] : memref<5x8xf32, #tpu.memory_space<vmem>>, vector<1x8xf32>
    tpu.vector_store %arg5[%c2_20, %c0_21], %69 {strides = array<i32>} : memref<5x8xf32, #tpu.memory_space<vmem>>, vector<1x8xf32>,
    %71 = math.erf %69 : vector<1x8xf32>
    %c2_22 = arith.constant 2 : index
    %c0_23 = arith.constant 0 : index
    %72 = vector.load %arg4[%c2_22, %c0_23] : memref<5x8xf32, #tpu.memory_space<vmem>>, vector<1x8xf32>
    tpu.vector_store %arg4[%c2_22, %c0_23], %71 {strides = array<i32>} : memref<5x8xf32, #tpu.memory_space<vmem>>, vector<1x8xf32>,
    %c3_24 = arith.constant 3 : index
    %73 = memref.load %arg1[%c3_24] : memref<20xf32, #tpu.memory_space<smem>>
    %74 = vector.broadcast %73 : f32 to vector<1x8xf32>
    %75 = arith.mulf %0, %74 : vector<1x8xf32>
    %c3_25 = arith.constant 3 : index
    %76 = memref.load %arg2[%c3_25] : memref<5xf32, #tpu.memory_space<smem>>
    %77 = vector.broadcast %76 : f32 to vector<1x8xf32>
    %78 = arith.addf %75, %77 : vector<1x8xf32>
    %c8 = arith.constant 8 : index
    %79 = memref.load %arg1[%c8] : memref<20xf32, #tpu.memory_space<smem>>
    %80 = vector.broadcast %79 : f32 to vector<1x8xf32>
    %81 = arith.mulf %1, %80 : vector<1x8xf32>
    %82 = arith.addf %78, %81 : vector<1x8xf32>
    %c13 = arith.constant 13 : index
    %83 = memref.load %arg1[%c13] : memref<20xf32, #tpu.memory_space<smem>>
    %84 = vector.broadcast %83 : f32 to vector<1x8xf32>
    %85 = arith.mulf %2, %84 : vector<1x8xf32>
    %86 = arith.addf %82, %85 : vector<1x8xf32>
    %c18 = arith.constant 18 : index
    %87 = memref.load %arg1[%c18] : memref<20xf32, #tpu.memory_space<smem>>
    %88 = vector.broadcast %87 : f32 to vector<1x8xf32>
    %89 = arith.mulf %3, %88 : vector<1x8xf32>
    %90 = arith.addf %86, %89 : vector<1x8xf32>
    %cst_26 = arith.constant 0.000000e+00 : f32
    %91 = vector.broadcast %cst_26 : f32 to vector<1x8xf32>
    %92 = arith.maximumf %90, %91 : vector<1x8xf32>
    %c3_27 = arith.constant 3 : index
    %c0_28 = arith.constant 0 : index
    %93 = vector.load %arg5[%c3_27, %c0_28] : memref<5x8xf32, #tpu.memory_space<vmem>>, vector<1x8xf32>
    tpu.vector_store %arg5[%c3_27, %c0_28], %92 {strides = array<i32>} : memref<5x8xf32, #tpu.memory_space<vmem>>, vector<1x8xf32>,
    %94 = math.erf %92 : vector<1x8xf32>
    %c3_29 = arith.constant 3 : index
    %c0_30 = arith.constant 0 : index
    %95 = vector.load %arg4[%c3_29, %c0_30] : memref<5x8xf32, #tpu.memory_space<vmem>>, vector<1x8xf32>
    tpu.vector_store %arg4[%c3_29, %c0_30], %94 {strides = array<i32>} : memref<5x8xf32, #tpu.memory_space<vmem>>, vector<1x8xf32>,
    %c4 = arith.constant 4 : index
    %96 = memref.load %arg1[%c4] : memref<20xf32, #tpu.memory_space<smem>>
    %97 = vector.broadcast %96 : f32 to vector<1x8xf32>
    %98 = arith.mulf %0, %97 : vector<1x8xf32>
    %c4_31 = arith.constant 4 : index
    %99 = memref.load %arg2[%c4_31] : memref<5xf32, #tpu.memory_space<smem>>
    %100 = vector.broadcast %99 : f32 to vector<1x8xf32>
    %101 = arith.addf %98, %100 : vector<1x8xf32>
    %c9 = arith.constant 9 : index
    %102 = memref.load %arg1[%c9] : memref<20xf32, #tpu.memory_space<smem>>
    %103 = vector.broadcast %102 : f32 to vector<1x8xf32>
    %104 = arith.mulf %1, %103 : vector<1x8xf32>
    %105 = arith.addf %101, %104 : vector<1x8xf32>
    %c14 = arith.constant 14 : index
    %106 = memref.load %arg1[%c14] : memref<20xf32, #tpu.memory_space<smem>>
    %107 = vector.broadcast %106 : f32 to vector<1x8xf32>
    %108 = arith.mulf %2, %107 : vector<1x8xf32>
    %109 = arith.addf %105, %108 : vector<1x8xf32>
    %c19 = arith.constant 19 : index
    %110 = memref.load %arg1[%c19] : memref<20xf32, #tpu.memory_space<smem>>
    %111 = vector.broadcast %110 : f32 to vector<1x8xf32>
    %112 = arith.mulf %3, %111 : vector<1x8xf32>
    %113 = arith.addf %109, %112 : vector<1x8xf32>
    %cst_32 = arith.constant 0.000000e+00 : f32
    %114 = vector.broadcast %cst_32 : f32 to vector<1x8xf32>
    %115 = arith.maximumf %113, %114 : vector<1x8xf32>
    %c4_33 = arith.constant 4 : index
    %c0_34 = arith.constant 0 : index
    %116 = vector.load %arg5[%c4_33, %c0_34] : memref<5x8xf32, #tpu.memory_space<vmem>>, vector<1x8xf32>
    tpu.vector_store %arg5[%c4_33, %c0_34], %115 {strides = array<i32>} : memref<5x8xf32, #tpu.memory_space<vmem>>, vector<1x8xf32>,
    %117 = math.erf %115 : vector<1x8xf32>
    %c4_35 = arith.constant 4 : index
    %c0_36 = arith.constant 0 : index
    %118 = vector.load %arg4[%c4_35, %c0_36] : memref<5x8xf32, #tpu.memory_space<vmem>>, vector<1x8xf32>
    tpu.vector_store %arg4[%c4_35, %c0_36], %117 {strides = array<i32>} : memref<5x8xf32, #tpu.memory_space<vmem>>, vector<1x8xf32>,
    return
  }
  func.func @transform_0(%arg0: i32) -> i32 {
    %c0_i32 = arith.constant 0 : i32
    %c0_i32_0 = arith.constant 0 : i32
    return %c0_i32 : i32
  }
  func.func @transform_1(%arg0: i32) -> i32 {
    %c0_i32 = arith.constant 0 : i32
    %c0_i32_0 = arith.constant 0 : i32
    return %c0_i32 : i32
  }
  func.func @transform_2(%arg0: i32) -> (i32, i32) {
    %c0_i32 = arith.constant 0 : i32
    %c0_i32_0 = arith.constant 0 : i32
    return %c0_i32, %arg0 : i32, i32
  }
  func.func @transform_3(%arg0: i32) -> (i32, i32) {
    %c0_i32 = arith.constant 0 : i32
    %c0_i32_0 = arith.constant 0 : i32
    return %c0_i32, %arg0 : i32, i32
  }
  func.func @transform_4(%arg0: i32) -> (i32, i32) {
    %c0_i32 = arith.constant 0 : i32
    %c0_i32_0 = arith.constant 0 : i32
    return %c0_i32, %arg0 : i32, i32
  }
}

</mosaic_0001>

<llo_original>
// kernel: tpu_custom_call.1
$region0: #{tpu_custom_call.1}
  #allocation0 [shape = 'u32[]', space=smem, size = 0x4, offset = 0x4, fixed_abs, tag = 'smem constant byte address 0x4 - core index']
  #allocation1 [shape = 'u32[144,128]{1,0:T(1,128)}', space=vmem, size = 0x12000, scoped, tag = 'internal scratch']
  %s0 = inlined_call_operand.hbm [shape: f32[20], index: 0, kind: input, shape index: {}]
  %s1 = inlined_call_operand.vmem [shape: f32[5], index: 1, kind: input, shape index: {}]
  %s2 = inlined_call_operand.hbm [shape: f32[4,8], index: 2, kind: input, shape index: {}]
  %s3 = inlined_call_operand.hbm [shape: f32[5,8], index: 3, kind: output, shape index: {0}]
  %s4 = inlined_call_operand.hbm [shape: f32[5,8], index: 4, kind: output, shape index: {1}]
  %5 = xla_tuple %s3, %s4
  %s6 = sld [smem:[#allocation0]]
  $region42: #{tpu_custom_call.1} parent=0
    _
  %s8 = ssub.s32 1, %s6
  %s9 = scalar_select 0, %s8, %s6
  $region1: #{tpu_custom_call.1} parent=0
    #allocation2 [shape = 'u8[512]{0}', space=smem, size = 0x200, scoped, tag = 'input window, operand 0, single buffered']
    #allocation3 [shape = 's32[1]{0}', space=sflag, size = 0x4, scoped, tag = 'scoped memory for tpu_custom_call.1']
    #allocation4 [shape = 's32[1]{0}', space=sflag, size = 0x4, scoped, tag = 'scoped memory for tpu_custom_call.1']
    #allocation5 [shape = 's32[1]{0}', space=sflag, size = 0x4, scoped, tag = 'scoped memory for tpu_custom_call.1']
    #allocation6 [shape = 's32[1]{0}', space=sflag, size = 0x4, scoped, tag = 'scoped memory for tpu_custom_call.1']
    #allocation7 [shape = 'u8[512]{0}', space=smem, size = 0x200, scoped, tag = 'input window, operand 1, single buffered']
    #allocation8 [shape = 'u8[2048]{0}', space=vmem, size = 0x800, scoped, tag = 'input window, operand 2, single buffered']
    #allocation9 [shape = 'u8[4096]{0}', space=vmem, size = 0x1000, scoped, tag = 'output window, operand 0, single buffered']
    #allocation10 [shape = 'u8[4096]{0}', space=vmem, size = 0x1000, scoped, tag = 'output window, operand 1, single buffered']
    #allocation11 [shape = 's32[1]{0}', space=sflag, size = 0x4, scoped, tag = 'scoped memory for tpu_custom_call.1']
    %10 = vsyncpa [#allocation5], 0
    %11 = vsyncpa [#allocation6], 0
    %12 = vsyncpa [#allocation3], 0
    %13 = vsyncpa [#allocation4], 0
    %14 = vsyncpa [#allocation11], 0
    // Predicated region
    $region2: #{tpu_custom_call.1} parent=1 // pred_check
      _
    $region3: #{tpu_custom_call.1} parent=1 // pred_check_branch
      %16 = sbr.rel (0) target = $region5
    $region4: #{tpu_custom_call.1} parent=1 // pred_region
      %s18 = ssub.s32 16, 16
      %19 = vsyncadd [#allocation5], %s18
      %22 = dma.hbm_to_smem %s0, 16, [#allocation2], [#allocation5]
    $region5: #{tpu_custom_call.1} parent=1 // pred_fallthru
      _
    // Predicated region
    $region6: #{tpu_custom_call.1} parent=1 // pred_check
      _
    $region7: #{tpu_custom_call.1} parent=1 // pred_check_branch
      %24 = sbr.rel (0) target = $region9
    $region8: #{tpu_custom_call.1} parent=1 // pred_region
      %s26 = ssub.s32 16, 16
      %27 = vsyncadd [#allocation6], %s26
      %s29 = sshll.u32 %s1, 4
      %s30 = int_to_ptr.vmem [resolvable:$true] %s29
      %32 = dma.vmem_to_smem %s30, 16, [#allocation7], [#allocation6]
    $region9: #{tpu_custom_call.1} parent=1 // pred_fallthru
      _
    // Predicated region
    $region10: #{tpu_custom_call.1} parent=1 // pred_check
      _
    $region11: #{tpu_custom_call.1} parent=1 // pred_check_branch
      %34 = sbr.rel (0) target = $region13
    $region12: #{tpu_custom_call.1} parent=1 // pred_region
      %s36 = ssub.s32 64, 64
      %37 = vsyncadd [#allocation3], %s36
      %s39 = sshll.u32 [#allocation8], 4
      %s40 = int_to_ptr.vmem [resolvable:$true] %s39
      %42 = dma.hbm_to_vmem [thread:$0]  %s2, 64, %s40, [#allocation3]
    $region13: #{tpu_custom_call.1} parent=1 // pred_fallthru
      _
    // Predicated region
    $region14: #{tpu_custom_call.1} parent=1 // pred_check
      _
    $region15: #{tpu_custom_call.1} parent=1 // pred_check_branch
      %44 = sbr.rel (0) target = $region17
    $region16: #{tpu_custom_call.1} parent=1 // pred_region
      %45 = dma.done [#allocation5], 16
    $region17: #{tpu_custom_call.1} parent=1 // pred_fallthru
      _
    // Predicated region
    $region18: #{tpu_custom_call.1} parent=1 // pred_check
      _
    $region19: #{tpu_custom_call.1} parent=1 // pred_check_branch
      %47 = sbr.rel (0) target = $region21
    $region20: #{tpu_custom_call.1} parent=1 // pred_region
      %48 = dma.done [#allocation6], 16
    $region21: #{tpu_custom_call.1} parent=1 // pred_fallthru
      _
    // Predicated region
    $region22: #{tpu_custom_call.1} parent=1 // pred_check
      _
    $region23: #{tpu_custom_call.1} parent=1 // pred_check_branch
      %50 = sbr.rel (0) target = $region25
    $region24: #{tpu_custom_call.1} parent=1 // pred_region
      %51 = dma.done [#allocation3], 64
    $region25: #{tpu_custom_call.1} parent=1 // pred_fallthru
      _
    %52 = sfence
    %v53 = vld [vmem:[#allocation8] sm:$0x1]
    %v54 = vld [vmem:[#allocation8 + $0x1] sm:$0x1]
    %v55 = vld [vmem:[#allocation8 + $0x2] sm:$0x1]
    %v56 = vld [vmem:[#allocation8 + $0x3] sm:$0x1]
    %s57 = sld [smem:[#allocation2]]
    %v58 = vstv %s57
    %v59 = vmul.f32 %v53, %v58
    %s60 = sld [smem:[#allocation7]]
    %v61 = vstv %s60
    %v62 = vadd.f32 %v59, %v61
    %s63 = sld [smem:[#allocation2 + $0x5]]
    %v64 = vstv %s63
    %v65 = vmul.f32 %v54, %v64
    %v66 = vadd.f32 %v62, %v65
    %s67 = sld [smem:[#allocation2 + $0xa]]
    %v68 = vstv %s67
    %v69 = vmul.f32 %v55, %v68
    %v70 = vadd.f32 %v66, %v69
    %s71 = sld [smem:[#allocation2 + $0xf]]
    %v72 = vstv %s71
    %v73 = vmul.f32 %v56, %v72
    %v74 = vadd.f32 %v70, %v73
    %v75 = vmax.f32 %v74, 0.0
    %vm76 = vcmask 57344
    %77 = vst.msk [vmem:[#allocation10] sm:$0x1] %vm76, %v75
    %v78 = verf.f32.pop %v75
    %79 = vst.msk [vmem:[#allocation9] sm:$0x1] %vm76, %v78
    %s80 = sld [smem:[#allocation2 + $0x1]]
    %v81 = vstv %s80
    %v82 = vmul.f32 %v53, %v81
    %s83 = sld [smem:[#allocation7 + $0x1]]
    %v84 = vstv %s83
    %v85 = vadd.f32 %v82, %v84
    %s86 = sld [smem:[#allocation2 + $0x6]]
    %v87 = vstv %s86
    %v88 = vmul.f32 %v54, %v87
    %v89 = vadd.f32 %v85, %v88
    %s90 = sld [smem:[#allocation2 + $0xb]]
    %v91 = vstv %s90
    %v92 = vmul.f32 %v55, %v91
    %v93 = vadd.f32 %v89, %v92
    %s94 = sld [smem:[#allocation2 + $0x10]]
    %v95 = vstv %s94
    %v96 = vmul.f32 %v56, %v95
    %v97 = vadd.f32 %v93, %v96
    %v98 = vmax.f32 %v97, 0.0
    %99 = vst.msk [vmem:[#allocation10 + $0x1] sm:$0x1] %vm76, %v98
    %v100 = verf.f32.pop %v98
    %101 = vst.msk [vmem:[#allocation9 + $0x1] sm:$0x1] %vm76, %v100
    %s102 = sld [smem:[#allocation2 + $0x2]]
    %v103 = vstv %s102
    %v104 = vmul.f32 %v53, %v103
    %s105 = sld [smem:[#allocation7 + $0x2]]
    %v106 = vstv %s105
    %v107 = vadd.f32 %v104, %v106
    %s108 = sld [smem:[#allocation2 + $0x7]]
    %v109 = vstv %s108
    %v110 = vmul.f32 %v54, %v109
    %v111 = vadd.f32 %v107, %v110
    %s112 = sld [smem:[#allocation2 + $0xc]]
    %v113 = vstv %s112
    %v114 = vmul.f32 %v55, %v113
    %v115 = vadd.f32 %v111, %v114
    %s116 = sld [smem:[#allocation2 + $0x11]]
    %v117 = vstv %s116
    %v118 = vmul.f32 %v56, %v117
    %v119 = vadd.f32 %v115, %v118
    %v120 = vmax.f32 %v119, 0.0
    %121 = vst.msk [vmem:[#allocation10 + $0x2] sm:$0x1] %vm76, %v120
    %v122 = verf.f32.pop %v120
    %123 = vst.msk [vmem:[#allocation9 + $0x2] sm:$0x1] %vm76, %v122
    %s124 = sld [smem:[#allocation2 + $0x3]]
    %v125 = vstv %s124
    %v126 = vmul.f32 %v53, %v125
    %s127 = sld [smem:[#allocation7 + $0x3]]
    %v128 = vstv %s127
    %v129 = vadd.f32 %v126, %v128
    %s130 = sld [smem:[#allocation2 + $0x8]]
    %v131 = vstv %s130
    %v132 = vmul.f32 %v54, %v131
    %v133 = vadd.f32 %v129, %v132
    %s134 = sld [smem:[#allocation2 + $0xd]]
    %v135 = vstv %s134
    %v136 = vmul.f32 %v55, %v135
    %v137 = vadd.f32 %v133, %v136
    %s138 = sld [smem:[#allocation2 + $0x12]]
    %v139 = vstv %s138
    %v140 = vmul.f32 %v56, %v139
    %v141 = vadd.f32 %v137, %v140
    %v142 = vmax.f32 %v141, 0.0
    %143 = vst.msk [vmem:[#allocation10 + $0x3] sm:$0x1] %vm76, %v142
    %v144 = verf.f32.pop %v142
    %145 = vst.msk [vmem:[#allocation9 + $0x3] sm:$0x1] %vm76, %v144
    %s146 = sld [smem:[#allocation2 + $0x4]]
    %v147 = vstv %s146
    %v148 = vmul.f32 %v53, %v147
    %s149 = sld [smem:[#allocation7 + $0x4]]
    %v150 = vstv %s149
    %v151 = vadd.f32 %v148, %v150
    %s152 = sld [smem:[#allocation2 + $0x9]]
    %v153 = vstv %s152
    %v154 = vmul.f32 %v54, %v153
    %v155 = vadd.f32 %v151, %v154
    %s156 = sld [smem:[#allocation2 + $0xe]]
    %v157 = vstv %s156
    %v158 = vmul.f32 %v55, %v157
    %v159 = vadd.f32 %v155, %v158
    %s160 = sld [smem:[#allocation2 + $0x13]]
    %v161 = vstv %s160
    %v162 = vmul.f32 %v56, %v161
    %v163 = vadd.f32 %v159, %v162
    %v164 = vmax.f32 %v163, 0.0
    %165 = vst.msk [vmem:[#allocation10 + $0x4] sm:$0x1] %vm76, %v164
    %v166 = verf.f32.pop %v164
    %167 = vst.msk [vmem:[#allocation9 + $0x4] sm:$0x1] %vm76, %v166
    // Predicated region
    $region26: #{tpu_custom_call.1} parent=1 // pred_check
      _
    $region27: #{tpu_custom_call.1} parent=1 // pred_check_branch
      %169 = sbr.rel (0) target = $region29
    $region28: #{tpu_custom_call.1} parent=1 // pred_region
      %s171 = ssub.s32 128, 128
      %172 = vsyncadd [#allocation4], %s171
      %s174 = sshll.u32 [#allocation9], 4
      %s175 = int_to_ptr.vmem [resolvable:$true] %s174
      %177 = dma.vmem_to_hbm [thread:$0]  %s175, 128, %s3, [#allocation4]
    $region29: #{tpu_custom_call.1} parent=1 // pred_fallthru
      _
    // Predicated region
    $region30: #{tpu_custom_call.1} parent=1 // pred_check
      _
    $region31: #{tpu_custom_call.1} parent=1 // pred_check_branch
      %179 = sbr.rel (0) target = $region33
    $region32: #{tpu_custom_call.1} parent=1 // pred_region
      %s181 = ssub.s32 128, 128
      %182 = vsyncadd [#allocation11], %s181
      %s184 = sshll.u32 [#allocation10], 4
      %s185 = int_to_ptr.vmem [resolvable:$true] %s184
      %187 = dma.vmem_to_hbm [thread:$0]  %s185, 128, %s4, [#allocation11]
    $region33: #{tpu_custom_call.1} parent=1 // pred_fallthru
      _
    // Predicated region
    $region34: #{tpu_custom_call.1} parent=1 // pred_check
      _
    $region35: #{tpu_custom_call.1} parent=1 // pred_check_branch
      %189 = sbr.rel (0) target = $region37
    $region36: #{tpu_custom_call.1} parent=1 // pred_region
      %190 = dma.done [#allocation4], 128
    $region37: #{tpu_custom_call.1} parent=1 // pred_fallthru
      _
    // Predicated region
    $region38: #{tpu_custom_call.1} parent=1 // pred_check
      _
    $region39: #{tpu_custom_call.1} parent=1 // pred_check_branch
      %192 = sbr.rel (0) target = $region41
    $region40: #{tpu_custom_call.1} parent=1 // pred_region
      %193 = dma.done [#allocation11], 128
    $region41: #{tpu_custom_call.1} parent=1 // pred_fallthru
      _
    %194 = vsyncpa [#allocation3], 1
    %195 = vsyncpa [#allocation4], 1
    %196 = vsyncpa [#allocation11], 1
    %197 = vsyncpa [#allocation5], 1
    %198 = vsyncpa [#allocation6], 1

</llo_original>
